<compile_context>
chip_gen: v6e
topology: v6e:2x2x1
jax: 0.10.0
libtpu: 0.0.40
codegen_flags: <defaults>
</compile_context>

<pallas_src>
import functools

import jax
import jax.numpy as jnp
from jax import lax
from jax.experimental import pallas as pl
from jax.experimental.pallas import tpu as pltpu

_VMEM_LIMIT = 48 * 1024 * 1024  # <= 48 MiB: safe on v5e/v6e (128 MiB) and v7x (64 MiB)


def _round_up(x, m):
    return (x + m - 1) // m * m


# -----------------------------------------------------------------------------
# Kernel A: input projection for BOTH directions (one big GEMM, hoisted out of
# the recurrence).  gates[d, r, :] = x[r, :] @ W_ih[d] + b[d]
# -----------------------------------------------------------------------------
def _gate_proj_kernel(x_ref, w_ref, b_ref, o_ref):
    o_ref[...] = (jnp.dot(x_ref[...], w_ref[...],
                          preferred_element_type=jnp.float32)
                  + b_ref[...])


def gate_projection(x_flat, wih_stacked, bias_stacked, *, tile_rows=256):
    """x_flat: [rows, Ein] bf16 (rows multiple of 8).
    wih_stacked: [2, Ein, 4Hp] bf16.  bias_stacked: [2, 1, 4Hp] f32.
    Returns gates [2, rows, 4Hp] f32."""
    rows, Ein = x_flat.shape
    G = wih_stacked.shape[-1]
    tr = min(tile_rows, rows)           # rows is a multiple of 8
    n_tiles = pl.cdiv(rows, tr)

    return pl.pallas_call(
        _gate_proj_kernel,
        out_shape=jax.ShapeDtypeStruct((2, rows, G), jnp.float32),
        grid_spec=pltpu.PrefetchScalarGridSpec(
            num_scalar_prefetch=0,
            grid=(2, n_tiles),
            in_specs=[
                pl.BlockSpec((tr, Ein), lambda d, i: (i, 0)),
                pl.BlockSpec((None, Ein, G), lambda d, i: (d, 0, 0)),
                pl.BlockSpec((None, 1, G), lambda d, i: (d, 0, 0)),
            ],
            out_specs=pl.BlockSpec((None, tr, G), lambda d, i: (d, i, 0)),
        ),
        compiler_params=pltpu.CompilerParams(
            dimension_semantics=("parallel", "parallel"),
            vmem_limit_bytes=_VMEM_LIMIT,
        ),
    )(x_flat, wih_stacked, bias_stacked)


# -----------------------------------------------------------------------------
# Kernel B: fused bidirectional LSTM recurrence.
#   grid = (direction, time_chunk); direction is "parallel" (2 TCs on v7x),
#   time is "arbitrary" (sequential).  h/c carried in VMEM scratch, W_hh
#   resident, precomputed gates consumed in Tc-sized chunks.
# -----------------------------------------------------------------------------
def _bilstm_kernel(len_ref, gates_ref, whh_ref, out_ref, h_scr, c_scr, *, Tc, Hp):
    d = pl.program_id(0)            # 0 = forward, 1 = backward
    c = pl.program_id(1)            # chunk counter (in processing order)
    n_chunks = pl.num_programs(1)

    @pl.when(c == 0)
    def _():
        h_scr[...] = jnp.zeros_like(h_scr)
        c_scr[...] = jnp.zeros_like(c_scr)

    # Chunk actually covered by this grid step (matches the BlockSpec index_map):
    # forward walks chunks 0..n-1, backward walks n-1..0.
    chunk = c + d * (n_chunks - 1 - 2 * c)
    base_t = chunk * Tc

    whh = whh_ref[...]              # (Hp, 4Hp) bf16, resident
    lens = len_ref[...]             # (Bp, 1) int32

    def step(j, carry):
        h, cs = carry
        lt = j + d * (Tc - 1 - 2 * j)      # local time: fwd j, bwd Tc-1-j
        pos = base_t + lt                  # original (unpadded) time index
        gates = gates_ref[lt] + jnp.dot(h.astype(jnp.bfloat16), whh,
                                        preferred_element_type=jnp.float32)
        i_g = jax.nn.sigmoid(gates[:, 0 * Hp:1 * Hp])   # PyTorch gate order i,f,g,o
        f_g = jax.nn.sigmoid(gates[:, 1 * Hp:2 * Hp])
        g_g = jnp.tanh(gates[:, 2 * Hp:3 * Hp])
        o_g = jax.nn.sigmoid(gates[:, 3 * Hp:4 * Hp])
        c_new = f_g * cs + i_g * g_g
        h_new = o_g * jnp.tanh(c_new)
        # pack_padded_sequence / pad_packed_sequence semantics: positions >=
        # length emit 0 and carry no state, so the backward pass effectively
        # starts (h=c=0) at the last valid token of each sequence.
        valid = lens > pos
        h_new = jnp.where(valid, h_new, 0.0)
        c_new = jnp.where(valid, c_new, 0.0)
        out_ref[lt] = h_new.astype(out_ref.dtype)
        return h_new, c_new

    hT, cT = lax.fori_loop(0, Tc, step, (h_scr[d], c_scr[d]), unroll=True)
    h_scr[d] = hT
    c_scr[d] = cT


def bilstm_recurrence(gates, lengths2d, whh_stacked, *, Tc, Hp):
    """gates: [2, S_pad, Bp, 4Hp] f32 (precomputed x@W_ih + b).
    lengths2d: [Bp, 1] int32.  whh_stacked: [2, Hp, 4Hp] bf16.
    Returns hidden states [2, S_pad, Bp, Hp] bf16."""
    _, S_pad, Bp, G = gates.shape
    n_chunks = S_pad // Tc

    def io_idx(d, c):
        return (d, c + d * (n_chunks - 1 - 2 * c), 0, 0)

    kern = functools.partial(_bilstm_kernel, Tc=Tc, Hp=Hp)
    return pl.pallas_call(
        kern,
        out_shape=jax.ShapeDtypeStruct((2, S_pad, Bp, Hp), jnp.bfloat16),
        grid_spec=pltpu.PrefetchScalarGridSpec(
            num_scalar_prefetch=0,
            grid=(2, n_chunks),
            in_specs=[
                pl.BlockSpec((Bp, 1), lambda d, c: (0, 0)),          # lengths
                pl.BlockSpec((None, Tc, Bp, G), io_idx),             # gate chunk
                pl.BlockSpec((None, Hp, G), lambda d, c: (d, 0, 0)),  # resident W_hh
            ],
            out_specs=pl.BlockSpec((None, Tc, Bp, Hp), io_idx),
            scratch_shapes=[
                pltpu.VMEM((2, Bp, Hp), jnp.float32),   # h carry (per direction)
                pltpu.VMEM((2, Bp, Hp), jnp.float32),   # c carry
            ],
        ),
        compiler_params=pltpu.CompilerParams(
            dimension_semantics=("parallel", "arbitrary"),
            vmem_limit_bytes=_VMEM_LIMIT,
        ),
    )(lengths2d, gates, whh_stacked)


# -----------------------------------------------------------------------------
# Kernel C: fused tag head (fc) + argmax; concat-free, stores only the V valid
# logits columns, argmax built from max/iota/min.
# -----------------------------------------------------------------------------
def _fc_argmax_kernel(hf_ref, hb_ref, w1_ref, w2_ref, b_ref, *out_refs,
                      store_logits):
    logits = (jnp.dot(hf_ref[...], w1_ref[...], preferred_element_type=jnp.float32)
              + jnp.dot(hb_ref[...], w2_ref[...], preferred_element_type=jnp.float32)
              + b_ref[...])                                   # (tm, V) f32
    if store_logits:
        logits_ref, tags_ref = out_refs
        logits_ref[...] = logits
    else:
        (tags_ref,) = out_refs
    # argmax with first-max tie-breaking (same as jnp.argmax), via supported
    # max / iota / min primitives.
    V = logits.shape[-1]
    col = lax.broadcasted_iota(jnp.int32, logits.shape, 1)
    row_max = jnp.max(logits, axis=-1, keepdims=True)
    tags = jnp.min(jnp.where(logits >= row_max, col, V), axis=-1, keepdims=True)
    tags_ref[...] = tags.astype(jnp.int32)


def fc_argmax(hf, hb, w1, w2, bias, *, tile_rows=256, store_logits=True):
    """hf/hb: [rows, Hp] bf16 (rows multiple of 8).  w1/w2: [Hp, V] bf16.
    bias: [1, V] f32.  Returns (logits [rows, V] f32 or None, tags [rows] i32)."""
    rows, Hp = hf.shape
    V = w1.shape[-1]
    tm = min(tile_rows, rows)                 # rows is a multiple of 8
    n_tiles = pl.cdiv(rows, tm)               # no round-up of rows; tail is masked

    out_shape, out_specs = [], []
    if store_logits:
        out_shape.append(jax.ShapeDtypeStruct((rows, V), jnp.float32))
        out_specs.append(pl.BlockSpec((tm, V), lambda i: (i, 0)))
    out_shape.append(jax.ShapeDtypeStruct((rows, 1), jnp.int32))
    out_specs.append(pl.BlockSpec((tm, 1), lambda i: (i, 0)))

    outs = pl.pallas_call(
        functools.partial(_fc_argmax_kernel, store_logits=store_logits),
        out_shape=tuple(out_shape),
        grid_spec=pltpu.PrefetchScalarGridSpec(
            num_scalar_prefetch=0,
            grid=(n_tiles,),
            in_specs=[
                pl.BlockSpec((tm, Hp), lambda i: (i, 0)),
                pl.BlockSpec((tm, Hp), lambda i: (i, 0)),
                pl.BlockSpec((Hp, V), lambda i: (0, 0)),   # resident weights
                pl.BlockSpec((Hp, V), lambda i: (0, 0)),
                pl.BlockSpec((1, V), lambda i: (0, 0)),
            ],
            out_specs=tuple(out_specs),
        ),
        compiler_params=pltpu.CompilerParams(
            dimension_semantics=("parallel",),   # row tiles shard across TCs
            vmem_limit_bytes=_VMEM_LIMIT,
        ),
    )(hf, hb, w1, w2, bias)

    if store_logits:
        return outs[0], outs[1].reshape(rows)
    return None, outs[0].reshape(rows)


# -----------------------------------------------------------------------------
# Parameter preparation (done ONCE, not per inference call).
# -----------------------------------------------------------------------------
def prepare_params(lstm_params, fc_w, fc_b):
    """lstm_params: list of ((wih_f, whh_f, b_f), (wih_b, whh_b, b_b)) per layer,
    wih: [E_in, 4H], whh: [H, 4H], b: [1, 4H] (= bias_ih + bias_hh).
    fc_w: [2H, V], fc_b: [V]."""
    H = lstm_params[0][0][1].shape[0]
    Hp = _round_up(H, 32)            # 4*Hp is a multiple of 128 lanes

    def pad_gate_cols(w):            # (..., 4H) -> (..., 4Hp), gate g at [g*Hp:g*Hp+H]
        return jnp.concatenate(
            [jnp.pad(w[..., g * H:(g + 1) * H],
                     [(0, 0)] * (w.ndim - 1) + [(0, Hp - H)]) for g in range(4)],
            axis=-1)

    layers = []
    for li, (p_f, p_b) in enumerate(lstm_params):
        wih_d, whh_d, b_d = [], [], []
        for (wih, whh, bias) in (p_f, p_b):
            wih_p = pad_gate_cols(wih.astype(jnp.float32))
            if li > 0:
                # deeper layers consume [hf(0:H) pad | hb(0:H) pad] of width 2*Hp
                scat = jnp.zeros((2 * Hp, 4 * Hp), jnp.float32)
                wih_p = scat.at[:H].set(wih_p[:H]).at[Hp:Hp + H].set(wih_p[H:2 * H])
            whh_p = jnp.zeros((Hp, 4 * Hp), jnp.float32).at[:H].set(
                pad_gate_cols(whh.astype(jnp.float32)))
            b_p = pad_gate_cols(bias.astype(jnp.float32).reshape(1, 4 * H))
            wih_d.append(wih_p); whh_d.append(whh_p); b_d.append(b_p)
        layers.append(dict(
            wih=jnp.stack(wih_d).astype(jnp.bfloat16),    # (2, Ein_p, 4Hp)
            whh=jnp.stack(whh_d).astype(jnp.bfloat16),    # (2, Hp, 4Hp)
            bias=jnp.stack(b_d),                          # (2, 1, 4Hp) f32
        ))

    V = fc_w.shape[-1]
    w1 = jnp.zeros((Hp, V), jnp.float32).at[:H].set(fc_w[:H].astype(jnp.float32))
    w2 = jnp.zeros((Hp, V), jnp.float32).at[:H].set(fc_w[H:2 * H].astype(jnp.float32))
    return dict(layers=layers, H=H, Hp=Hp,
                fc_w1=w1.astype(jnp.bfloat16), fc_w2=w2.astype(jnp.bfloat16),
                fc_b=fc_b.astype(jnp.float32).reshape(1, V))


# -----------------------------------------------------------------------------
# Full BiLSTMTagger forward (+ argmax).
# -----------------------------------------------------------------------------
def bilstm_tagger_apply(states, lengths, params, *, tile_rows=256, time_chunk=16,
                        store_logits=True):
    """states: [B, S, E] f32; lengths: [B] int.  Returns (logits [B,S,V] or None,
    tags [B,S] int32)."""
    B, S, E = states.shape
    Hp = params["Hp"]
    V = params["fc_b"].shape[-1]
    Bp = _round_up(B, 8)
    Tc = min(time_chunk, S)
    S_pad = _round_up(S, Tc)

    # emb_dropout / pre_fc_dropout / inter-layer bilstm_dropout are identity in
    # eval mode (predict_tags path).
    xt = jnp.transpose(states, (1, 0, 2))                         # time-major [S,B,E]
    xt = jnp.pad(xt, ((0, S_pad - S), (0, Bp - B), (0, 0))).astype(jnp.bfloat16)
    lens = jnp.pad(lengths.astype(jnp.int32), (0, Bp - B)).reshape(Bp, 1)

    rows = S_pad * Bp
    hidden = None
    n_layers = len(params["layers"])
    for li, layer in enumerate(params["layers"]):
        x_flat = xt.reshape(rows, xt.shape[-1])
        gates = gate_projection(x_flat, layer["wih"], layer["bias"],
                                tile_rows=tile_rows)              # (2, rows, 4Hp)
        gates = gates.reshape(2, S_pad, Bp, 4 * Hp)
        hidden = bilstm_recurrence(gates, lens, layer["whh"], Tc=Tc, Hp=Hp)
        if li + 1 < n_layers:
            # TODO(synk): feed hf/hb as two inputs (two dot-accumulates) to
            # gate_projection instead of this XLA concat for deeper layers.
            xt = jnp.concatenate([hidden[0], hidden[1]], axis=-1)  # (S_pad,Bp,2Hp)

    hf = hidden[0].reshape(rows, Hp)
    hb = hidden[1].reshape(rows, Hp)
    logits_flat, tags_flat = fc_argmax(hf, hb, params["fc_w1"], params["fc_w2"],
                                       params["fc_b"], tile_rows=tile_rows,
                                       store_logits=store_logits)

    tags = tags_flat.reshape(S_pad, Bp)[:S, :B].T                  # [B, S]
    logits = None
    if store_logits:
        logits = logits_flat.reshape(S_pad, Bp, V)[:S, :B].transpose(1, 0, 2)  # [B,S,V]
    return logits, tags


# -----------------------------------------------------------------------------
# Pure-JAX f32 reference (PyTorch packed-sequence BiLSTM semantics, 1 layer).
# -----------------------------------------------------------------------------
def reference_forward(states, lengths, lstm_params, fc_w, fc_b):
    B, S, E = states.shape
    (wih_f, whh_f, b_f), (wih_b, whh_b, b_b) = lstm_params[0]
    H = whh_f.shape[0]

    def cell(x_t, h, c, wih, whh, bias):
        gates = x_t @ wih + h @ whh + bias
        i = jax.nn.sigmoid(gates[:, :H])
        f = jax.nn.sigmoid(gates[:, H:2 * H])
        g = jnp.tanh(gates[:, 2 * H:3 * H])
        o = jax.nn.sigmoid(gates[:, 3 * H:])
        c = f * c + i * g
        h = o * jnp.tanh(c)
        return h, c

    h = jnp.zeros((B, H), jnp.float32); c = jnp.zeros((B, H), jnp.float32)
    outs_f = []
    for t in range(S):
        hn, cn = cell(states[:, t], h, c, wih_f, whh_f, b_f)
        valid = (lengths > t)[:, None]
        h = jnp.where(valid, hn, 0.0); c = jnp.where(valid, cn, 0.0)
        outs_f.append(h)

    h = jnp.zeros((B, H), jnp.float32); c = jnp.zeros((B, H), jnp.float32)
    outs_b = [None] * S
    for t in range(S - 1, -1, -1):
        hn, cn = cell(states[:, t], h, c, wih_b, whh_b, b_b)
        valid = (lengths > t)[:, None]
        h = jnp.where(valid, hn, 0.0); c = jnp.where(valid, cn, 0.0)
        outs_b[t] = h

    hcat = jnp.concatenate([jnp.stack(outs_f, 1), jnp.stack(outs_b, 1)], axis=-1)
    return jnp.einsum("bsh,hv->bsv", hcat, fc_w) + fc_b


if __name__ == "__main__":
    # Shapes consistent with the module: batch=2, padded_seq_len=8,
    # embedding_dim=32, bilstm_hidden_size=32 (16 per direction), n_classes=16,
    # bilstm_n_layers=1.
    B, S, E, HID, V = 2, 8, 32, 32, 16
    H = HID // 2

    key = jax.random.PRNGKey(0)
    ks = jax.random.split(key, 6)

    states = jax.random.normal(ks[0], (B, S, E), dtype=jnp.float32)
    lengths = jnp.array([8, 5], dtype=jnp.int32)   # variable-length sequences

    def mk_dir(k):
        k1, k2, k3 = jax.random.split(k, 3)
        wih = jax.random.normal(k1, (E, 4 * H), jnp.float32) * 0.1
        whh = jax.random.normal(k2, (H, 4 * H), jnp.float32) * 0.1
        bias = jax.random.normal(k3, (1, 4 * H), jnp.float32) * 0.05
        return wih, whh, bias

    lstm_params = [(mk_dir(ks[1]), mk_dir(ks[2]))]
    fc_w = jax.random.normal(ks[3], (2 * H, V), jnp.float32) * 0.1
    fc_b = jax.random.normal(ks[4], (V,), jnp.float32) * 0.05

    params = prepare_params(lstm_params, fc_w, fc_b)   # padded/bf16, done once

    logits, tags = bilstm_tagger_apply(states, lengths, params)
    jax.block_until_ready((logits, tags))

    assert logits.shape == (B, S, V)
    assert tags.shape == (B, S)

    # Logits vs. pure-JAX f32 reference (tolerance covers bf16 weights/activations).
    logits_ref = reference_forward(states, lengths, lstm_params, fc_w, fc_b)
    max_err = float(jnp.max(jnp.abs(logits - logits_ref)))
    assert jnp.allclose(logits, logits_ref, atol=2e-2, rtol=2e-2), max_err

    # In-kernel argmax must match argmax of the kernel's own logits exactly.
    assert jnp.array_equal(tags, jnp.argmax(logits, axis=-1).astype(tags.dtype))

    # Tags-only variant (predict_tags hot path: no logits HBM writeback).
    _, tags_only = bilstm_tagger_apply(states, lengths, params, store_logits=False)
    jax.block_until_ready(tags_only)
    assert jnp.array_equal(tags_only, tags)

    # TODO(synk): predict_tags' per-example mask_tensor gather and
    # target_vocab.transform_ids are host-side Python bookkeeping.

    print("KERNEL_OK")
</pallas_src>

<mosaic_0001>
module attributes {stable_mosaic.version = 11 : i64} {
  func.func @_gate_proj_kernel(%arg0: i32, %arg1: i32, %arg2: memref<64x32xbf16, #tpu.memory_space<vmem>>, %arg3: memref<1x32x128xbf16, #tpu.memory_space<vmem>>, %arg4: memref<1x1x128xf32, #tpu.memory_space<vmem>>, %arg5: memref<1x64x128xf32, #tpu.memory_space<vmem>>) attributes {dimension_semantics = [#tpu.dimension_semantics<parallel>, #tpu.dimension_semantics<parallel>], iteration_bounds = array<i64: 2, 1>, scalar_prefetch = 0 : i64, scratch_operands = 0 : i64, tpu.core_type = #tpu.core_type<tc>, window_params = [{transform_indices = @transform_0, window_bounds = array<i64: 64, 32>}, {transform_indices = @transform_1, window_bounds = array<i64: 1, 32, 128>}, {transform_indices = @transform_2, window_bounds = array<i64: 1, 1, 128>}, {transform_indices = @transform_3, window_bounds = array<i64: 1, 64, 128>}]} {
    %c0 = arith.constant 0 : index
    %c0_0 = arith.constant 0 : index
    %0 = vector.load %arg2[%c0, %c0_0] : memref<64x32xbf16, #tpu.memory_space<vmem>>, vector<64x32xbf16>
    %c0_1 = arith.constant 0 : index
    %c0_2 = arith.constant 0 : index
    %c0_3 = arith.constant 0 : index
    %1 = vector.load %arg3[%c0_1, %c0_2, %c0_3] : memref<1x32x128xbf16, #tpu.memory_space<vmem>>, vector<1x32x128xbf16>
    %2 = vector.shape_cast %1 : vector<1x32x128xbf16> to vector<32x128xbf16>
    %cst = arith.constant dense<0.000000e+00> : vector<64x128xf32>
    %3 = tpu.matmul %0, %2, %cst {dimension_numbers = #tpu.dot_dimension_numbers<[1], [0], [0], [1], [0, 0, 1, 1], [], []>} : vector<64x32xbf16>, vector<32x128xbf16>, vector<64x128xf32> -> vector<64x128xf32>
    %c0_4 = arith.constant 0 : index
    %c0_5 = arith.constant 0 : index
    %c0_6 = arith.constant 0 : index
    %4 = vector.load %arg4[%c0_4, %c0_5, %c0_6] : memref<1x1x128xf32, #tpu.memory_space<vmem>>, vector<1x1x128xf32>
    %5 = vector.shape_cast %4 : vector<1x1x128xf32> to vector<1x128xf32>
    %6 = vector.broadcast %5 : vector<1x128xf32> to vector<64x128xf32>
    %7 = arith.addf %3, %6 : vector<64x128xf32>
    %c0_7 = arith.constant 0 : index
    %c0_8 = arith.constant 0 : index
    %c0_9 = arith.constant 0 : index
    %8 = vector.load %arg5[%c0_7, %c0_8, %c0_9] : memref<1x64x128xf32, #tpu.memory_space<vmem>>, vector<1x64x128xf32>
    %9 = vector.shape_cast %8 : vector<1x64x128xf32> to vector<64x128xf32>
    %10 = vector.shape_cast %7 : vector<64x128xf32> to vector<1x64x128xf32>
    tpu.vector_store %arg5[%c0_7, %c0_8, %c0_9], %10 {strides = array<i32>} : memref<1x64x128xf32, #tpu.memory_space<vmem>>, vector<1x64x128xf32>,
    return
  }
  func.func @transform_0(%arg0: i32, %arg1: i32) -> (i32, i32) {
    %c0_i32 = arith.constant 0 : i32
    %c0_i32_0 = arith.constant 0 : i32
    return %arg1, %c0_i32 : i32, i32
  }
  func.func @transform_1(%arg0: i32, %arg1: i32) -> (i32, i32, i32) {
    %c0_i32 = arith.constant 0 : i32
    %c0_i32_0 = arith.constant 0 : i32
    %c0_i32_1 = arith.constant 0 : i32
    return %arg0, %c0_i32, %c0_i32_0 : i32, i32, i32
  }
  func.func @transform_2(%arg0: i32, %arg1: i32) -> (i32, i32, i32) {
    %c0_i32 = arith.constant 0 : i32
    %c0_i32_0 = arith.constant 0 : i32
    %c0_i32_1 = arith.constant 0 : i32
    return %arg0, %c0_i32, %c0_i32_0 : i32, i32, i32
  }
  func.func @transform_3(%arg0: i32, %arg1: i32) -> (i32, i32, i32) {
    %c0_i32 = arith.constant 0 : i32
    %c0_i32_0 = arith.constant 0 : i32
    return %arg0, %arg1, %c0_i32 : i32, i32, i32
  }
}

</mosaic_0001>

<llo_original>
// kernel: tpu_custom_call.1
$region0: #{tpu_custom_call.1}
  #allocation0 [shape = 'u32[]', space=smem, size = 0x4, offset = 0x4, fixed_abs, tag = 'smem constant byte address 0x4 - core index']
  #allocation1 [shape = 'u32[144,128]{1,0:T(1,128)}', space=vmem, size = 0x12000, scoped, tag = 'internal scratch']
  %s0 = inlined_call_operand.vmem [shape: bf16[64,32], index: 0, kind: input, shape index: {}]
  %s1 = inlined_call_operand.vmem [shape: bf16[2,32,128], index: 1, kind: input, shape index: {}]
  %s2 = inlined_call_operand.vmem [shape: f32[2,1,128], index: 2, kind: input, shape index: {}]
  %s3 = inlined_call_operand.hbm [shape: f32[2,64,128], index: 3, kind: output, shape index: {}]
  %s4 = sld [smem:[#allocation0]]
  $region45: #{tpu_custom_call.1} parent=0
    _
  %s6 = ssub.s32 1, %s4
  %s7 = scalar_select 0, %s6, %s4
  $region1: #{tpu_custom_call.1} parent=0
    #allocation2 [shape = 'u8[65536]{0}', space=vmem, size = 0x10000, scoped, tag = 'output window, operand 0']
    #allocation3 [shape = 's32[2]{0}', space=sflag, size = 0x8, scoped, tag = 'scoped memory for tpu_custom_call.1']
    %8 = vsyncpa [#allocation3], 0
    %s9 = scalar_lea.sflag [#allocation3], 1
    %10 = vsyncpa %s9, 0
    loop: start=0, step=1, limit=4
    $region2: #{tpu_custom_call.1} parent=1 // loop_pre_header
      _
    $region3: #{tpu_custom_call.1} parent=1 // loop_header
      %s12 = sphi 0, %s16
      %p13 = scmp.ge.s32.totalorder %s12, 4
      %s19 = sphi 0, %s31
      %s20 = sphi 0, %s27
      %s21 = sphi 0, %s19
      %s22 = sphi 0, %s20
      %s23 = sphi 0, %s21
      %s24 = sphi 0, %s22
      %s34 = sphi 0, %s36
      %s37 = sphi 0, %s34
      %s38 = sphi 0, %s37
      %s54 = sphi 0, %s38
      %s60 = sphi 0, %s62
      %s63 = sphi 0, %s60
      %s64 = sphi 0, %s63
      %s80 = sphi 0, %s64
      %s86 = sphi 0, %s88
      %s89 = sphi 0, %s86
      %s90 = sphi 0, %s89
      %s106 = sphi 0, %s90
      %s114 = sphi 0, %s116
      %s117 = sphi 0, %s114
      %s118 = sphi 0, %s117
      %s134 = sphi 0, %s118
    $region4: #{tpu_custom_call.1} parent=1 // loop_header_branch
      %15 = sbr.rel (%p13) target = $region8
    $region5: #{tpu_custom_call.1} parent=1 // loop_body
      %s17 = ssub.s32 %s12, 1
      %s18 = ssub.s32 %s12, 2
      %s25 = sadd.s32 1, %s20
      %p26 = scmp.ge.s32.totalorder %s25, 1
      %s27 = scalar_select %p26, 0, %s25
      %s28 = sadd.s32 1, %s19
      %s29 = scalar_select %p26, %s28, %s19
      %p30 = scmp.ge.s32.totalorder %s29, 2
      %s31 = scalar_select %p30, 0, %s29
      %s32 = ssub.s32 %s20, %s27
      %p33 = scmp.eq.s32.totalorder %s32, 0
      %s35 = sadd.s32 %s34, 1
      %s36 = scalar_select %p33, %s34, %s35
      %p39 = pneg %p33
      %p40 = scmp.eq.s32.totalorder %s12, 1
      %p41 = por %p39, %p40
      %p42 = scmp.ne.s32.totalorder %s34, %s37
      %p43 = scmp.eq.s32.totalorder %s12, 0
      %p44 = por %p42, %p43
      %p45 = scmp.ne.s32.totalorder %s34, %s37
      %p46 = scmp.eq.s32.totalorder %s17, 1
      %p47 = por %p45, %p46
      %p48 = scmp.ne.s32.totalorder %s37, %s38
      %p49 = scmp.eq.s32.totalorder %s17, 0
      %p50 = por %p48, %p49
      %p51 = scmp.ne.s32.totalorder %s37, %s38
      %p52 = scmp.eq.s32.totalorder %s18, 1
      %p53 = por %p51, %p52
      %p55 = scmp.ne.s32.totalorder %s38, %s54
      %p56 = scmp.eq.s32.totalorder %s18, 0
      %p57 = por %p55, %p56
      %s58 = ssub.s32 %s19, %s31
      %p59 = scmp.eq.s32.totalorder %s58, 0
      %s61 = sadd.s32 %s60, 1
      %s62 = scalar_select %p59, %s60, %s61
      %p65 = pneg %p59
      %p66 = scmp.eq.s32.totalorder %s12, 1
      %p67 = por %p65, %p66
      %p68 = scmp.ne.s32.totalorder %s60, %s63
      %p69 = scmp.eq.s32.totalorder %s12, 0
      %p70 = por %p68, %p69
      %p71 = scmp.ne.s32.totalorder %s60, %s63
      %p72 = scmp.eq.s32.totalorder %s17, 1
      %p73 = por %p71, %p72
      %p74 = scmp.ne.s32.totalorder %s63, %s64
      %p75 = scmp.eq.s32.totalorder %s17, 0
      %p76 = por %p74, %p75
      %p77 = scmp.ne.s32.totalorder %s63, %s64
      %p78 = scmp.eq.s32.totalorder %s18, 1
      %p79 = por %p77, %p78
      %p81 = scmp.ne.s32.totalorder %s64, %s80
      %p82 = scmp.eq.s32.totalorder %s18, 0
      %p83 = por %p81, %p82
      %s84 = ssub.s32 %s19, %s31
      %p85 = scmp.eq.s32.totalorder %s84, 0
      %s87 = sadd.s32 %s86, 1
      %s88 = scalar_select %p85, %s86, %s87
      %p91 = pneg %p85
      %p92 = scmp.eq.s32.totalorder %s12, 1
      %p93 = por %p91, %p92
      %p94 = scmp.ne.s32.totalorder %s86, %s89
      %p95 = scmp.eq.s32.totalorder %s12, 0
      %p96 = por %p94, %p95
      %p97 = scmp.ne.s32.totalorder %s86, %s89
      %p98 = scmp.eq.s32.totalorder %s17, 1
      %p99 = por %p97, %p98
      %p100 = scmp.ne.s32.totalorder %s89, %s90
      %p101 = scmp.eq.s32.totalorder %s17, 0
      %p102 = por %p100, %p101
      %p103 = scmp.ne.s32.totalorder %s89, %s90
      %p104 = scmp.eq.s32.totalorder %s18, 1
      %p105 = por %p103, %p104
      %p107 = scmp.ne.s32.totalorder %s90, %s106
      %p108 = scmp.eq.s32.totalorder %s18, 0
      %p109 = por %p107, %p108
      %s110 = ssub.s32 %s19, %s31
      %s111 = ssub.s32 %s20, %s27
      %s112 = sor.u32 %s110, %s111
      %p113 = scmp.eq.s32.totalorder %s112, 0
      %s115 = sadd.s32 %s114, 1
      %s116 = scalar_select %p113, %s114, %s115
      %p119 = pneg %p113
      %p120 = scmp.eq.s32.totalorder %s12, 1
      %p121 = por %p119, %p120
      %p122 = scmp.ne.s32.totalorder %s114, %s117
      %p123 = scmp.eq.s32.totalorder %s12, 0
      %p124 = por %p122, %p123
      %p125 = scmp.ne.s32.totalorder %s114, %s117
      %p126 = scmp.eq.s32.totalorder %s17, 1
      %p127 = por %p125, %p126
      %p128 = scmp.ne.s32.totalorder %s117, %s118
      %p129 = scmp.eq.s32.totalorder %s17, 0
      %p130 = por %p128, %p129
      %p131 = scmp.ne.s32.totalorder %s117, %s118
      %p132 = scmp.eq.s32.totalorder %s18, 1
      %p133 = por %p131, %p132
      %p135 = scmp.ne.s32.totalorder %s118, %s134
      %p136 = scmp.eq.s32.totalorder %s18, 0
      %p137 = por %p135, %p136
      %p138 = scmp.le.s32.totalorder 1, %s12
      %p139 = scmp.lt.s32.totalorder %s12, 3
      %p140 = pnand %p138, %p139
      %p141 = pneg %p140
      // Predicated region
      $region9: #{tpu_custom_call.1} parent=5 // pred_check
        _
      $region10: #{tpu_custom_call.1} parent=5 // pred_check_branch
        %143 = sbr.rel (%p140) target = $region12
      $region11: #{tpu_custom_call.1} parent=5 // pred_region
        %s144 = ssub.s32 %s12, 1
        // Predicated region
        $region13: #{tpu_custom_call.1} parent=11 // pred_check
          %p145 = pneg %p50
        $region14: #{tpu_custom_call.1} parent=11 // pred_check_branch
          %147 = sbr.rel (%p145) target = $region16
        $region15: #{tpu_custom_call.1} parent=11 // pred_region
          %s148 = smul.u32 8, %s22
          %p149 = scmp.lt.s32.totalorder %s148, 7
          %s150 = scalar_select %p149, %s148, 7
          %s151 = smul.addr %s150, 4
          %s152 = scalar_lea.vmem %s0, %s151
          %s153 = smul.u32 8, %s22
        $region16: #{tpu_custom_call.1} parent=11 // pred_fallthru
          _
      $region12: #{tpu_custom_call.1} parent=5 // pred_fallthru
        _
      %p154 = scmp.lt.s32.totalorder %s12, 2
      // Predicated region
      $region17: #{tpu_custom_call.1} parent=5 // pred_check
        %p155 = pneg %p154
      $region18: #{tpu_custom_call.1} parent=5 // pred_check_branch
        %157 = sbr.rel (%p155) target = $region20
      $region19: #{tpu_custom_call.1} parent=5 // pred_region
        // Predicated region
        $region21: #{tpu_custom_call.1} parent=19 // pred_check
          %p158 = pneg %p70
        $region22: #{tpu_custom_call.1} parent=19 // pred_check_branch
          %160 = sbr.rel (%p158) target = $region24
        $region23: #{tpu_custom_call.1} parent=19 // pred_region
          %p161 = scmp.lt.s32.totalorder %s19, 1
          %s162 = scalar_select %p161, %s19, 1
          %s163 = smul.addr %s162, 4
          %s164 = smul.addr %s163, 4
          %s165 = scalar_lea.vmem %s1, %s164
        $region24: #{tpu_custom_call.1} parent=19 // pred_fallthru
          _
        // Predicated region
        $region25: #{tpu_custom_call.1} parent=19 // pred_check
          %p166 = pneg %p96
        $region26: #{tpu_custom_call.1} parent=19 // pred_check_branch
          %168 = sbr.rel (%p166) target = $region28
        $region27: #{tpu_custom_call.1} parent=19 // pred_region
          %p169 = scmp.lt.s32.totalorder %s19, 1
          %s170 = scalar_select %p169, %s19, 1
          %s171 = scalar_lea.vmem %s2, %s170
        $region28: #{tpu_custom_call.1} parent=19 // pred_fallthru
          _
      $region20: #{tpu_custom_call.1} parent=5 // pred_fallthru
        _
      %p172 = scmp.le.s32.totalorder 1, %s12
      %p173 = scmp.lt.s32.totalorder %s12, 3
      %p174 = pnand %p172, %p173
      %p175 = pneg %p174
      // Predicated region
      $region29: #{tpu_custom_call.1} parent=5 // pred_check
        _
      $region30: #{tpu_custom_call.1} parent=5 // pred_check_branch
        %177 = sbr.rel (%p174) target = $region32
      $region31: #{tpu_custom_call.1} parent=5 // pred_region
        %s178 = ssub.s32 %s12, 1
        %s179 = smul.u32 8, %s22
        %p180 = scmp.lt.s32.totalorder %s179, 7
        %s181 = scalar_select %p180, %s179, 7
        %s182 = smul.addr %s181, 4
        %s183 = scalar_lea.vmem %s0, %s182
        %p184 = pneg %p50
        %p185 = pneg %p47
        %p186 = scmp.lt.s32.totalorder %s21, 1
        %s187 = scalar_select %p186, %s21, 1
        %s188 = smul.addr %s187, 4
        %s189 = smul.addr %s188, 4
        %s190 = scalar_lea.vmem %s1, %s189
        %p191 = pneg %p76
        %p192 = pneg %p73
        %p193 = scmp.lt.s32.totalorder %s21, 1
        %s194 = scalar_select %p193, %s21, 1
        %s195 = scalar_lea.vmem %s2, %s194
        %p196 = pneg %p102
        %p197 = pneg %p99
        %p198 = pneg %p130
        %p199 = pneg %p127
        %s200 = sand.u32 %s117, 1
        %s201 = scalar_lea.sflag [#allocation3], %s200
        %s202 = sand.u32 %s117, 1
        %s203 = smul.addr %s202, 64
        %s204 = scalar_lea.vmem [#allocation2], %s203
        %s205 = smul.u32 8, %s22
        %p206 = scmp.lt.s32.totalorder %s205, 7
        %s207 = scalar_select %p206, %s205, 7
        %s208 = smul.addr %s207, 4
        %s209 = scalar_lea.vmem %s0, %s208
        %s210 = smul.u32 8, %s22
        %p211 = scmp.lt.s32.totalorder %s21, 1
        %s212 = scalar_select %p211, %s21, 1
        %s213 = smul.addr %s212, 4
        %s214 = smul.addr %s213, 4
        %s215 = scalar_lea.vmem %s1, %s214
        %p216 = scmp.lt.s32.totalorder %s21, 1
        %s217 = scalar_select %p216, %s21, 1
        %s218 = scalar_lea.vmem %s2, %s217
        %s219 = smul.u32 8, %s22
        %v221 = vld [vmem:[%s209] sm:$0xf]
        %v222 = vld [vmem:[%s209 + $0x4] sm:$0xf]
        %v223 = vld [vmem:[%s209 + $0x8] sm:$0xf]
        %v224 = vld [vmem:[%s209 + $0xc] sm:$0xf]
        %v225 = vld [vmem:[%s209 + $0x10] sm:$0xf]
        %v226 = vld [vmem:[%s209 + $0x14] sm:$0xf]
        %v227 = vld [vmem:[%s209 + $0x18] sm:$0xf]
        %v228 = vld [vmem:[%s209 + $0x1c] sm:$0xf]
        %v229 = vld [vmem:[%s215] sm:$0xf]
        %v230 = vld [vmem:[%s215 + $0x4] sm:$0xf]
        %v231 = vld [vmem:[%s215 + $0x8] sm:$0xf]
        %v232 = vld [vmem:[%s215 + $0xc] sm:$0xf]
        %v233 = vld [vmem:[%s218] sm:$0x1]
        %v235 = vlaneseq
        %v236 = vshrl.u32 %v235, 7
        %v237 = vsub.s32 0, %v236
        %v238 = vrot.slane %v233, %v237
        %v248 = vunpack.c.l.b16 %v221
        %v249 = vunpack.c.l.b16 %v222
        %v250 = vunpack.c.l.b16 %v223
        %v251 = vunpack.c.l.b16 %v224
        %v252 = vunpack.c.l.b16 %v225
        %v253 = vunpack.c.l.b16 %v226
        %v254 = vunpack.c.l.b16 %v227
        %v255 = vunpack.c.l.b16 %v228
        %v256 = vpack.c.b16 %v249, %v248
        %v257 = vpack.c.b16 %v251, %v250
        %v258 = vpack.c.b16 %v253, %v252
        %v259 = vpack.c.b16 %v255, %v254
        %v264 = vunpack.c.l.b16 %v229
        %v265 = vunpack.c.l.b16 %v230
        %v266 = vunpack.c.l.b16 %v231
        %v267 = vunpack.c.l.b16 %v232
        %v268 = vpack.c.b16 %v265, %v264
        %v269 = vpack.c.b16 %v267, %v266
        %vm272 = vcmask 261120
        %v274 = vsel %vm272, %v256, 0
        %v277 = vsel %vm272, %v257, 0
        %v280 = vsel %vm272, %v258, 0
        %v283 = vsel %vm272, %v259, 0
        %285 = vmatprep.subr.bf16.mxu0 0
        %286 = vmatpush1.bf16.msra.mxu0 0
        %287 = vmatprep.subr.bf16.mxu0 0
        %288 = vmatpush1.bf16.msra.mxu0 0
        %289 = vmatprep.subr.bf16.mxu0 0
        %290 = vmatpush1.bf16.msra.mxu0 0
        %291 = vmatprep.subr.bf16.mxu0 0
        %292 = vmatpush1.bf16.msra.mxu0 0
        %293 = vmatprep.subr.bf16.mxu0 0
        %294 = vmatpush1.bf16.msra.mxu0 0
        %295 = vmatprep.subr.bf16.mxu0 0
        %296 = vmatpush1.bf16.msra.mxu0 0
        %297 = vmatprep.subr.bf16.mxu0 0
        %298 = vmatpush1.bf16.msra.mxu0 %v269
        %299 = vmatprep.subr.bf16.mxu0 0
        %300 = vmatpush1.bf16.msra.mxu0 %v268
        %301 = vmatprep.subr.bf16.mxu0 0
        %302 = vmatpush2.bf16.msra.mxu0 0
        %303 = vmatprep.subr.bf16.mxu0 0
        %304 = vmatpush2.bf16.msra.mxu0 0
        %305 = vmatprep.subr.bf16.mxu0 0
        %306 = vmatpush2.bf16.msra.mxu0 0
        %307 = vmatprep.subr.bf16.mxu0 0
        %308 = vmatpush2.bf16.msra.mxu0 0
        %309 = vmatprep.subr.bf16.mxu0 0
        %310 = vmatpush2.bf16.msra.mxu0 0
        %311 = vmatprep.subr.bf16.mxu0 0
        %312 = vmatpush2.bf16.msra.mxu0 0
        %313 = vmatprep.subr.bf16.mxu0 0
        %314 = vmatpush2.bf16.msra.mxu0 0
        %315 = vmatprep.subr.bf16.mxu0 0
        %316 = vmatpush2.bf16.msra.mxu0 0
        %317 = vmatprep.mubr.bf16.mxu0 0
        %318 = vmatmul.mubr.bf16.gmra.mxu0 %v274
        %v319 = vpop.f32.mrf.mxu0
        %v320 = vadd.f32 %v238, %v319
        %v321 = vpop.f32.mrf.mxu0
        %v322 = vpop.f32.mrf.mxu0
        %v323 = vadd.f32 %v238, %v322
        %v324 = vpop.f32.mrf.mxu0
        %325 = vmatprep.mubr.bf16.mxu0 0
        %326 = vmatmul.mubr.bf16.gmra.mxu0 %v277
        %v327 = vpop.f32.mrf.mxu0
        %v328 = vadd.f32 %v238, %v327
        %v329 = vpop.f32.mrf.mxu0
        %v330 = vpop.f32.mrf.mxu0
        %v331 = vadd.f32 %v238, %v330
        %v332 = vpop.f32.mrf.mxu0
        %333 = vmatprep.mubr.bf16.mxu0 0
        %334 = vmatmul.mubr.bf16.gmra.mxu0 %v280
        %v335 = vpop.f32.mrf.mxu0
        %v336 = vadd.f32 %v238, %v335
        %v337 = vpop.f32.mrf.mxu0
        %v338 = vpop.f32.mrf.mxu0
        %v339 = vadd.f32 %v238, %v338
        %v340 = vpop.f32.mrf.mxu0
        %341 = vmatprep.mubr.bf16.mxu0 0
        %342 = vmatmul.mubr.bf16.gmra.mxu0 %v283
        %v343 = vpop.f32.mrf.mxu0
        %v344 = vadd.f32 %v238, %v343
        %v345 = vpop.f32.mrf.mxu0
        %v346 = vpop.f32.mrf.mxu0
        %v347 = vadd.f32 %v238, %v346
        %v348 = vpop.f32.mrf.mxu0
        %349 = vdwg.mxu0
        %350 = vst [vmem:[%s204] sm:$0xff] %v320
        %351 = vst [vmem:[%s204 + $0x8] sm:$0xff] %v323
        %352 = vst [vmem:[%s204 + $0x10] sm:$0xff] %v328
        %353 = vst [vmem:[%s204 + $0x18] sm:$0xff] %v331
        %354 = vst [vmem:[%s204 + $0x20] sm:$0xff] %v336
        %355 = vst [vmem:[%s204 + $0x28] sm:$0xff] %v339
        %356 = vst [vmem:[%s204 + $0x30] sm:$0xff] %v344
        %357 = vst [vmem:[%s204 + $0x38] sm:$0xff] %v347
        %s358 = sand.u32 %s117, 1
        %s359 = scalar_lea.sflag [#allocation3], %s358
        %s360 = sand.u32 %s117, 1
        %s361 = smul.addr %s360, 64
        %s362 = scalar_lea.vmem [#allocation2], %s361
        // Predicated region
        $region33: #{tpu_custom_call.1} parent=31 // pred_check
          %p363 = pneg %p127
        $region34: #{tpu_custom_call.1} parent=31 // pred_check_branch
          %365 = sbr.rel (%p363) target = $region36
        $region35: #{tpu_custom_call.1} parent=31 // pred_region
          %s366 = smul.u32 8, %s22
          %s368 = ssub.s32 1024, 1024
          %369 = vsyncadd %s359, %s368
          %s370 = smul.addr %s21, 8
          %s371 = sadd.s32 %s366, %s370
          %s372 = smul.addr %s371, 128
          %s373 = scalar_lea.hbm %s3, %s372
          %s374 = sshll.u32 %s362, 4
          %s375 = int_to_ptr.vmem [resolvable:$true] %s374
          %380 = dma.vmem_to_hbm [thread:$0]  %s375, 1024, %s373, %s359, 128, 128, 8
        $region36: #{tpu_custom_call.1} parent=31 // pred_fallthru
          _
      $region32: #{tpu_custom_call.1} parent=5 // pred_fallthru
        _
      %p381 = scmp.le.s32.totalorder 2, %s12
      // Predicated region
      $region37: #{tpu_custom_call.1} parent=5 // pred_check
        %p382 = pneg %p381
      $region38: #{tpu_custom_call.1} parent=5 // pred_check_branch
        %384 = sbr.rel (%p382) target = $region40
      $region39: #{tpu_custom_call.1} parent=5 // pred_region
        %s385 = ssub.s32 %s12, 2
        // Predicated region
        $region41: #{tpu_custom_call.1} parent=39 // pred_check
          %p386 = pneg %p133
        $region42: #{tpu_custom_call.1} parent=39 // pred_check_branch
          %388 = sbr.rel (%p386) target = $region44
        $region43: #{tpu_custom_call.1} parent=39 // pred_region
          %s389 = sand.u32 %s118, 1
          %s390 = scalar_lea.sflag [#allocation3], %s389
          %s391 = sand.u32 %s118, 1
          %s392 = smul.addr %s391, 64
          %s393 = scalar_lea.vmem [#allocation2], %s392
          %394 = dma.done %s390, 1024
        $region44: #{tpu_custom_call.1} parent=39 // pred_fallthru
          _
      $region40: #{tpu_custom_call.1} parent=5 // pred_fallthru
        _
    $region6: #{tpu_custom_call.1} parent=1 // loop_footer
      %s16 = sadd.s32 1, %s12
    $region7: #{tpu_custom_call.1} parent=1 // loop_footer_branch
      %11 = sbr.rel target = $region3
    $region8: #{tpu_custom_call.1} parent=1 // loop_exit
      _
    %395 = vsyncpa [#allocation3], 1
    %s396 = scalar_lea.sflag [#allocation3], 1
    %397 = vsyncpa %s396, 1

</llo_original>
